<compile_context>
chip_gen: v5e
topology: v5e:2x2
jax: 0.10.0
libtpu: 0.0.40
codegen_flags: <defaults>
</compile_context>

<pallas_src>
import functools

import jax
import jax.numpy as jnp
from jax.experimental import pallas as pl
from jax.experimental.pallas import tpu as pltpu


def _ce_kernel(sols_ref, y_ref, out_ref, acc_ref, *, batch_size, tile_rows, ragged):
    pid = pl.program_id(0)
    nsteps = pl.num_programs(0)

    # Init the per-lane accumulator on the first grid step.
    @pl.when(pid == 0)
    def _():
        acc_ref[...] = jnp.zeros_like(acc_ref)

    # Hot path: elementwise multiply (VPU) + sublane-only reduce to (1, C).
    prod = sols_ref[...].astype(jnp.float32) * y_ref[...].astype(jnp.float32)

    if ragged:
        # Mask rows past the true batch size in the padded last tile.
        row = jax.lax.broadcasted_iota(jnp.int32, (tile_rows, 1), 0) + pid * tile_rows
        prod = jnp.where(row < batch_size, prod, 0.0)

    acc_ref[...] += jnp.sum(prod, axis=0, keepdims=True)

    # Finalize once: single cross-lane reduce, divide by the *global* B, negate.
    @pl.when(pid == nsteps - 1)
    def _():
        out_ref[0, 0] = -(jnp.sum(acc_ref[...]) / jnp.float32(batch_size))


def cross_entropy(
    sols: jax.Array,
    y_log_soft: jax.Array,
    *,
    target_block_bytes: int = 4 * 1024 * 1024,
) -> jax.Array:
    assert sols.shape == y_log_soft.shape and sols.ndim == 2
    B, C = sols.shape
    itemsize = max(
        jnp.dtype(sols.dtype).itemsize, jnp.dtype(y_log_soft.dtype).itemsize
    )

    # Pick the tile height by bytes (~target_block_bytes per input block),
    # rounded down to a multiple of 8 (sublane granularity), capped at B.
    tb = max(8, target_block_bytes // max(1, C * itemsize))
    tb = max(8, (tb // 8) * 8)
    if tb >= B:
        tb = B  # single full-extent tile (always a legal block shape)

    num_tiles = pl.cdiv(B, tb)
    ragged = (B % tb) != 0

    kernel = functools.partial(
        _ce_kernel, batch_size=B, tile_rows=tb, ragged=ragged
    )

    out = pl.pallas_call(
        kernel,
        out_shape=jax.ShapeDtypeStruct((1, 1), jnp.float32),
        grid=(num_tiles,),
        in_specs=[
            pl.BlockSpec((tb, C), lambda i: (i, 0)),
            pl.BlockSpec((tb, C), lambda i: (i, 0)),
        ],
        out_specs=pl.BlockSpec(
            (1, 1), lambda i: (0, 0), memory_space=pltpu.MemorySpace.SMEM
        ),
        scratch_shapes=[pltpu.VMEM((1, C), jnp.float32)],
        compiler_params=pltpu.CompilerParams(
            dimension_semantics=("arbitrary",),  # reduction axis (accumulator)
            vmem_limit_bytes=48 * 1024 * 1024,
        ),
    )(sols, y_log_soft)
    return out[0, 0]


if __name__ == "__main__":
    key = jax.random.PRNGKey(0)
    k1, k2, k3, k4 = jax.random.split(key, 4)

    # --- Test 1: small, lane-aligned shape (matches the module's intent). ---
    B, C = 8, 128
    sols = jax.nn.softmax(jax.random.normal(k1, (B, C), dtype=jnp.float32), axis=1)
    y_log_soft = jax.nn.log_softmax(
        jax.random.normal(k2, (B, C), dtype=jnp.float32), axis=1
    )

    loss = cross_entropy(sols, y_log_soft)
    loss = jax.block_until_ready(loss)

    ref = -(sols * y_log_soft).sum(axis=1).mean()
    assert jnp.allclose(loss, ref, rtol=1e-5, atol=1e-5), (loss, ref)

    # --- Test 2: exercise the tiled + ragged-tail path (forced small tiles). ---
    B2, C2 = 300, 512
    sols2 = jax.nn.softmax(jax.random.normal(k3, (B2, C2), dtype=jnp.float32), axis=1)
    y2 = jax.nn.log_softmax(jax.random.normal(k4, (B2, C2), dtype=jnp.float32), axis=1)

    loss2 = cross_entropy(sols2, y2, target_block_bytes=64 * 1024)  # -> 32-row tiles
    loss2 = jax.block_until_ready(loss2)

    ref2 = -(sols2 * y2).sum(axis=1).mean()
    assert jnp.allclose(loss2, ref2, rtol=1e-5, atol=1e-5), (loss2, ref2)

    print("KERNEL_OK")
</pallas_src>

<mosaic_0001>
module attributes {stable_mosaic.version = 11 : i64} {
  func.func @_ce_kernel(%arg0: i32, %arg1: memref<8x128xf32, #tpu.memory_space<vmem>>, %arg2: memref<8x128xf32, #tpu.memory_space<vmem>>, %arg3: memref<1x1xf32, #tpu.memory_space<smem>>, %arg4: memref<1x128xf32, #tpu.memory_space<vmem>>) attributes {dimension_semantics = [#tpu.dimension_semantics<arbitrary>], iteration_bounds = array<i64: 1>, scalar_prefetch = 0 : i64, scratch_operands = 1 : i64, tpu.core_type = #tpu.core_type<tc>, window_params = [{transform_indices = @transform_0, window_bounds = array<i64: 8, 128>}, {transform_indices = @transform_1, window_bounds = array<i64: 8, 128>}, {transform_indices = @transform_2, window_bounds = array<i64: 1, 1>}]} {
    %c0_i32 = arith.constant 0 : i32
    %0 = arith.cmpi eq, %arg0, %c0_i32 : i32
    %1 = arith.extui %0 : i1 to i32
    %c0_i32_0 = arith.constant 0 : i32
    %2 = arith.cmpi ne, %1, %c0_i32_0 : i32
    scf.if %2 {
      %cst_10 = arith.constant 0.000000e+00 : f32
      %14 = vector.broadcast %cst_10 : f32 to vector<1x128xf32>
      %c0_11 = arith.constant 0 : index
      %c0_12 = arith.constant 0 : index
      %15 = vector.load %arg4[%c0_11, %c0_12] : memref<1x128xf32, #tpu.memory_space<vmem>>, vector<1x128xf32>
      tpu.vector_store %arg4[%c0_11, %c0_12], %14 {strides = array<i32>} : memref<1x128xf32, #tpu.memory_space<vmem>>, vector<1x128xf32>,
    } else {
    }
    %c0 = arith.constant 0 : index
    %c0_1 = arith.constant 0 : index
    %3 = vector.load %arg1[%c0, %c0_1] : memref<8x128xf32, #tpu.memory_space<vmem>>, vector<8x128xf32>
    %c0_2 = arith.constant 0 : index
    %c0_3 = arith.constant 0 : index
    %4 = vector.load %arg2[%c0_2, %c0_3] : memref<8x128xf32, #tpu.memory_space<vmem>>, vector<8x128xf32>
    %5 = arith.mulf %3, %4 : vector<8x128xf32>
    %c0_4 = arith.constant 0 : index
    %c0_5 = arith.constant 0 : index
    %6 = vector.load %arg4[%c0_4, %c0_5] : memref<1x128xf32, #tpu.memory_space<vmem>>, vector<1x128xf32>
    %cst = arith.constant dense<0.000000e+00> : vector<128xf32>
    %7 = vector.multi_reduction <add>, %5, %cst [0] : vector<8x128xf32> to vector<128xf32>
    %8 = vector.shape_cast %7 : vector<128xf32> to vector<1x128xf32>
    %9 = arith.addf %6, %8 : vector<1x128xf32>
    %c0_6 = arith.constant 0 : index
    %c0_7 = arith.constant 0 : index
    %10 = vector.load %arg4[%c0_6, %c0_7] : memref<1x128xf32, #tpu.memory_space<vmem>>, vector<1x128xf32>
    tpu.vector_store %arg4[%c0_6, %c0_7], %9 {strides = array<i32>} : memref<1x128xf32, #tpu.memory_space<vmem>>, vector<1x128xf32>,
    %c0_i32_8 = arith.constant 0 : i32
    %11 = arith.cmpi eq, %arg0, %c0_i32_8 : i32
    %12 = arith.extui %11 : i1 to i32
    %c0_i32_9 = arith.constant 0 : i32
    %13 = arith.cmpi ne, %12, %c0_i32_9 : i32
    scf.if %13 {
      %c0_10 = arith.constant 0 : index
      %c0_11 = arith.constant 0 : index
      %14 = vector.load %arg4[%c0_10, %c0_11] : memref<1x128xf32, #tpu.memory_space<vmem>>, vector<1x128xf32>
      %15 = vector.shape_cast %14 : vector<1x128xf32> to vector<1x1x128xf32>
      %cst_12 = arith.constant dense<0.000000e+00> : vector<1xf32>
      %16 = vector.multi_reduction <add>, %15, %cst_12 [1, 2] : vector<1x1x128xf32> to vector<1xf32>
      %17 = vector.shape_cast %16 : vector<1xf32> to vector<1x1x1xf32>
      %18 = vector.extract %17[0, 0, 0] : f32 from vector<1x1x1xf32>
      %cst_13 = arith.constant 8.000000e+00 : f32
      %19 = arith.divf %18, %cst_13 : f32
      %cst_14 = arith.constant 0.000000e+00 : f32
      %20 = arith.subf %cst_14, %19 : f32
      %c0_15 = arith.constant 0 : index
      %c0_16 = arith.constant 0 : index
      %21 = memref.load %arg3[%c0_15, %c0_16] : memref<1x1xf32, #tpu.memory_space<smem>>
      memref.store %20, %arg3[%c0_15, %c0_16] : memref<1x1xf32, #tpu.memory_space<smem>>
    } else {
    }
    return
  }
  func.func @transform_0(%arg0: i32) -> (i32, i32) {
    %c0_i32 = arith.constant 0 : i32
    %c0_i32_0 = arith.constant 0 : i32
    return %arg0, %c0_i32 : i32, i32
  }
  func.func @transform_1(%arg0: i32) -> (i32, i32) {
    %c0_i32 = arith.constant 0 : i32
    %c0_i32_0 = arith.constant 0 : i32
    return %arg0, %c0_i32 : i32, i32
  }
  func.func @transform_2(%arg0: i32) -> (i32, i32) {
    %c0_i32 = arith.constant 0 : i32
    %c0_i32_0 = arith.constant 0 : i32
    %c0_i32_1 = arith.constant 0 : i32
    return %c0_i32, %c0_i32_0 : i32, i32
  }
}

</mosaic_0001>

<llo_original>
// kernel: tpu_custom_call.1
$region0: #{tpu_custom_call.1}
  #allocation0 [shape = 'u32[]', space=smem, size = 0x4, offset = 0x4, fixed_abs, tag = 'smem constant byte address 0x4 - core index']
  #allocation1 [shape = 'u32[72,128]{1,0:T(1,128)}', space=vmem, size = 0x9000, scoped, tag = 'internal scratch']
  #allocation2 [shape = 'f32[1,128]{1,0:T(1,128)}', space=vmem, size = 0x200, scoped, tag = 'scratch operand']
  %s0 = inlined_call_operand.hbm [shape: f32[8,128], index: 0, kind: input, shape index: {}]
  %s1 = inlined_call_operand.hbm [shape: f32[8,128], index: 1, kind: input, shape index: {}]
  %s2 = inlined_call_operand.hbm [shape: f32[1,1], index: 2, kind: output, shape index: {}]
  %s3 = sld [smem:[#allocation0]]
  $region34: #{tpu_custom_call.1} parent=0
    _
  %s5 = ssub.s32 1, %s3
  %s6 = scalar_select 0, %s5, %s3
  $region1: #{tpu_custom_call.1} parent=0
    #allocation3 [shape = 'u8[4096]{0}', space=vmem, size = 0x1000, scoped, tag = 'input window, operand 0, single buffered']
    #allocation4 [shape = 's32[1]{0}', space=sflag, size = 0x4, scoped, tag = 'scoped memory for tpu_custom_call.1']
    #allocation5 [shape = 's32[1]{0}', space=sflag, size = 0x4, scoped, tag = 'scoped memory for tpu_custom_call.1']
    #allocation6 [shape = 'u8[4096]{0}', space=vmem, size = 0x1000, scoped, tag = 'input window, operand 1, single buffered']
    #allocation7 [shape = 's32[1]{0}', space=sflag, size = 0x4, scoped, tag = 'scoped memory for tpu_custom_call.1']
    #allocation8 [shape = 'u8[512]{0}', space=smem, size = 0x200, scoped, tag = 'output window, operand 0, single buffered']
    %7 = vsyncpa [#allocation4], 0
    %8 = vsyncpa [#allocation7], 0
    %9 = vsyncpa [#allocation5], 0
    // Predicated region
    $region2: #{tpu_custom_call.1} parent=1 // pred_check
      _
    $region3: #{tpu_custom_call.1} parent=1 // pred_check_branch
      %11 = sbr.rel (0) target = $region5
    $region4: #{tpu_custom_call.1} parent=1 // pred_region
      %13 = vsyncadd [#allocation4], 0
      %s15 = sshll.u32 %s0, 4
      %s16 = int_to_ptr.hbm [resolvable:$true] %s15
      %s17 = sshll.u32 [#allocation3], 4
      %s18 = int_to_ptr.vmem [resolvable:$true] %s17
      %20 = dma.hbm_to_vmem [thread:$0]  %s16, 128, %s18, [#allocation4]
    $region5: #{tpu_custom_call.1} parent=1 // pred_fallthru
      _
    // Predicated region
    $region6: #{tpu_custom_call.1} parent=1 // pred_check
      _
    $region7: #{tpu_custom_call.1} parent=1 // pred_check_branch
      %22 = sbr.rel (0) target = $region9
    $region8: #{tpu_custom_call.1} parent=1 // pred_region
      %24 = vsyncadd [#allocation7], 0
      %s26 = sshll.u32 %s1, 4
      %s27 = int_to_ptr.hbm [resolvable:$true] %s26
      %s28 = sshll.u32 [#allocation6], 4
      %s29 = int_to_ptr.vmem [resolvable:$true] %s28
      %31 = dma.hbm_to_vmem [thread:$0]  %s27, 128, %s29, [#allocation7]
    $region9: #{tpu_custom_call.1} parent=1 // pred_fallthru
      _
    // Predicated region
    $region10: #{tpu_custom_call.1} parent=1 // pred_check
      _
    $region11: #{tpu_custom_call.1} parent=1 // pred_check_branch
      %33 = sbr.rel (0) target = $region13
    $region12: #{tpu_custom_call.1} parent=1 // pred_region
      %35 = dma.done [#allocation4], 128
    $region13: #{tpu_custom_call.1} parent=1 // pred_fallthru
      _
    // Predicated region
    $region14: #{tpu_custom_call.1} parent=1 // pred_check
      _
    $region15: #{tpu_custom_call.1} parent=1 // pred_check_branch
      %37 = sbr.rel (0) target = $region17
    $region16: #{tpu_custom_call.1} parent=1 // pred_region
      %39 = dma.done [#allocation7], 128
    $region17: #{tpu_custom_call.1} parent=1 // pred_fallthru
      _
    %p40 = scmp.eq.s32.totalorder 0, 0
    // Predicated region
    $region18: #{tpu_custom_call.1} parent=1 // pred_check
      %p41 = pneg %p40
    $region19: #{tpu_custom_call.1} parent=1 // pred_check_branch
      %43 = sbr.rel (%p41) target = $region21
    $region20: #{tpu_custom_call.1} parent=1 // pred_region
      %44 = vst [vmem:[#allocation2] sm:$0x1] 0.0
    $region21: #{tpu_custom_call.1} parent=1 // pred_fallthru
      _
    %v45 = vld [vmem:[#allocation3] sm:$0xff]
    %v46 = vld [vmem:[#allocation6] sm:$0xff]
    %v47 = vmul.f32 %v45, %v46
    %v48 = vld [vmem:[#allocation2] sm:$0x1]
    %v49 = vrot.slane %v47, 4
    %v50 = vadd.f32 %v47, %v49
    %v51 = vrot.slane %v50, 2
    %v52 = vadd.f32 %v50, %v51
    %v53 = vrot.slane %v52, 1
    %v54 = vadd.f32 %v52, %v53
    %v55 = vadd.f32 %v48, %v54
    %56 = vst [vmem:[#allocation2] sm:$0x1] %v55
    // Predicated region
    $region22: #{tpu_custom_call.1} parent=1 // pred_check
      %p57 = pneg %p40
    $region23: #{tpu_custom_call.1} parent=1 // pred_check_branch
      %59 = sbr.rel (%p57) target = $region25
    $region24: #{tpu_custom_call.1} parent=1 // pred_region
      %v60 = vld [vmem:[#allocation2] sm:$0x1]
      %vm61 = vcmask 1040384
      %v62 = vsel %vm61, %v60, 0.0
      %63 = vadd.xlane.f32.xlu0 %v62
      %v64 = vpop.xlane.xlu0 %63
      %v65 = vrot.slane %v64, 4
      %v66 = vadd.f32 %v64, %v65
      %v67 = vrot.slane %v66, 2
      %v68 = vadd.f32 %v66, %v67
      %v69 = vrot.slane %v68, 1
      %v70 = vadd.f32 %v68, %v69
      %s71 = vtos %v70
      %v72 = vrcp.pop 8.0
      %v73 = vmul.f32 8.0, %v72
      %v74 = vsub.f32 1.0, %v73
      %v75 = vmul.f32 %v72, %v74
      %v76 = vadd.f32 %v72, %v75
      %vm77 = vweird.f32 %v72
      %v78 = vsel %vm77, %v72, %v76
      %s79 = vtos %v78
      %s80 = smul.f32 %s71, %s79
      %s81 = ssub.f32 0.0, %s80
      %s82 = scalar_lea.smem [#allocation8], 0
      %83 = sst [smem:[%s82]] %s81
    $region25: #{tpu_custom_call.1} parent=1 // pred_fallthru
      _
    // Predicated region
    $region26: #{tpu_custom_call.1} parent=1 // pred_check
      _
    $region27: #{tpu_custom_call.1} parent=1 // pred_check_branch
      %85 = sbr.rel (0) target = $region29
    $region28: #{tpu_custom_call.1} parent=1 // pred_region
      %87 = vsyncadd [#allocation5], 0
      %s89 = sshll.u32 %s2, 4
      %s90 = int_to_ptr.hbm [resolvable:$true] %s89
      %92 = dma.smem_to_hbm [#allocation8], 16, %s90, [#allocation5]
    $region29: #{tpu_custom_call.1} parent=1 // pred_fallthru
      _
    // Predicated region
    $region30: #{tpu_custom_call.1} parent=1 // pred_check
      _
    $region31: #{tpu_custom_call.1} parent=1 // pred_check_branch
      %94 = sbr.rel (0) target = $region33
    $region32: #{tpu_custom_call.1} parent=1 // pred_region
      %96 = dma.done [#allocation5], 16
    $region33: #{tpu_custom_call.1} parent=1 // pred_fallthru
      _
    %97 = sfence
    %98 = vsyncpa [#allocation4], 1
    %99 = vsyncpa [#allocation7], 1
    %100 = vsyncpa [#allocation5], 1

</llo_original>
